<compile_context>
chip_gen: v7x
topology: tpu7x:2x2x1
jax: 0.10.0
libtpu: 0.0.40
codegen_flags: <defaults>
</compile_context>

<pallas_src>
import numpy as np
import jax
import jax.numpy as jnp
from jax import lax
from jax.experimental import pallas as pl
from jax.experimental.pallas import tpu as pltpu

N, C, H, W = 2, 4, 16, 16          # batch, channels (in == out), spatial
KH = KW = 3
NTAPS = KH * KW                    # 9
EPS = 1e-5
L = N * H * W                      # lane axis: 512 (multiple of 128 -> dense)
KDIM = 40                          # im2col contraction: 9*C=36, padded to 8-aligned 40
TAPS = [(dy, dx) for dy in range(KH) for dx in range(KW)]


def _tap_masks_np():
    """(9, L) float mask: 1 where the tap's neighbour lies inside the image."""
    hs = np.arange(H)
    ws = np.arange(W)
    rows = []
    for dy, dx in TAPS:
        mh = (hs + dy - 1 >= 0) & (hs + dy - 1 < H)
        mw = (ws + dx - 1 >= 0) & (ws + dx - 1 < W)
        m = (mh[:, None] & mw[None, :]).astype(np.float32).reshape(H * W)
        rows.append(np.tile(m, N))
    return np.stack(rows)


_TAP_MASKS = _tap_masks_np()       # module-level constant, built exactly once


def _residual_kernel(x_ref, s0_ref, b0_ref, w1_ref, s1_ref, b1_ref, w2_ref,
                     mask_ref, o_ref, p_ref):
    """Single invocation, whole batch.

    x_ref    : (C, L)     input, L = N*H*W on lanes
    s*/b*    : (C, 1)     folded BatchNorm scale / bias (lane-broadcast)
    w*_ref   : (C, KDIM)  im2col weights, column = tap*C + c_in (cols 36:40 zero)
    mask_ref : (9, L)     per-tap validity mask (emulates conv zero-padding)
    o_ref    : (C, L)     output
    p_ref    : (KDIM, L)  im2col patch scratch, fully rewritten by every conv
    """
    x = x_ref[...]
    zeros_pad = jnp.zeros((C, L), jnp.float32)   # hoisted: pad rows 36:40

    def tap(inp, t):
        dy, dx = TAPS[t]
        off = (dy - 1) * W + (dx - 1)
        if off == 0:
            return inp                           # centre tap: no shift, always valid
        return pltpu.roll(inp, (-off) % L, axis=1) * mask_ref[t:t + 1, :]

    def conv3x3(inp, w_ref):
        # Fused full-height (8, L) patch stores: two taps per store; the odd
        # 9th tap is paired with the zero rows so every vst is a full-vreg
        # store and the zero weight columns always contract against zeros.
        for i in range(NTAPS // 2):
            p_ref[2 * i * C:(2 * i + 2) * C, :] = jnp.concatenate(
                [tap(inp, 2 * i), tap(inp, 2 * i + 1)], axis=0)
        p_ref[(NTAPS - 1) * C:, :] = jnp.concatenate(
            [tap(inp, NTAPS - 1), zeros_pad], axis=0)
        # One fused matmul per conv: (C_out, 40) @ (40, L) -> (C_out, L).
        return jnp.dot(w_ref[...], p_ref[...],
                       preferred_element_type=jnp.float32)

    # ---- right branch: BN -> (conv3x3 s1 + BN + ReLU) -> conv3x3 s1 ----
    y = x * s0_ref[...] + b0_ref[...]
    z = conv3x3(y, w1_ref)
    z = jnp.maximum(z * s1_ref[...] + b1_ref[...], 0.0)
    r = conv3x3(z, w2_ref)

    # ---- residual: right(x) + x   (res_type == 1, stride == 1) ----
    o_ref[...] = (r + x).astype(o_ref.dtype)


def _pack_weights(w_hwio):
    """(KH, KW, Cin, Cout) HWIO -> (Cout, KDIM), column = tap*Cin + cin."""
    c_in, c_out = w_hwio.shape[2], w_hwio.shape[3]
    wt = jnp.transpose(w_hwio, (3, 0, 1, 2)).reshape(c_out, KH * KW * c_in)
    return jnp.pad(wt, ((0, 0), (0, KDIM - KH * KW * c_in)))


def prepare_params(g0, be0, m0, v0, w1, g1, be1, m1, v1, w2):
    """One-time prep (outside the per-call path): fold inference-mode BN into
    per-channel scale/bias and pack conv weights into the im2col layout."""
    s0 = g0 / jnp.sqrt(v0 + EPS)
    b0 = be0 - m0 * s0
    s1 = g1 / jnp.sqrt(v1 + EPS)
    b1 = be1 - m1 * s1
    return (s0.reshape(-1, 1), b0.reshape(-1, 1), _pack_weights(w1),
            s1.reshape(-1, 1), b1.reshape(-1, 1), _pack_weights(w2))


@jax.jit
def residual_block_pallas(x_nchw, params):
    s0, b0, w1p, s1, b1, w2p = params
    n, c, h, w = x_nchw.shape
    assert (n, c, h, w) == (N, C, H, W)

    # Lane-dense kernel layout: channels on sublanes, flattened (N,H,W) on lanes.
    x_mat = jnp.transpose(x_nchw, (1, 0, 2, 3)).reshape(c, L)

    vmem = pl.BlockSpec(memory_space=pltpu.MemorySpace.VMEM)
    out_mat = pl.pallas_call(
        _residual_kernel,
        out_shape=jax.ShapeDtypeStruct((c, L), jnp.float32),
        in_specs=[vmem] * 8,
        out_specs=vmem,
        scratch_shapes=[pltpu.VMEM((KDIM, L), jnp.float32)],
    )(x_mat, s0, b0, w1p, s1, b1, w2p, jnp.asarray(_TAP_MASKS))

    return jnp.transpose(out_mat.reshape(c, n, h, w), (1, 0, 2, 3))  # NCHW


def residual_block_ref(x_nhwc, raw):
    """Pure-JAX reference (NHWC) for correctness checking."""
    g0, be0, m0, v0, w1, g1, be1, m1, v1, w2 = raw

    def bn(v, g, b, m, var):
        return (v - m) / jnp.sqrt(var + EPS) * g + b

    dn = ('NHWC', 'HWIO', 'NHWC')
    y = bn(x_nhwc, g0, be0, m0, v0)
    z = lax.conv_general_dilated(y, w1, (1, 1), 'SAME', dimension_numbers=dn)
    z = jnp.maximum(bn(z, g1, be1, m1, v1), 0.0)
    r = lax.conv_general_dilated(z, w2, (1, 1), 'SAME', dimension_numbers=dn)
    return r + x_nhwc


if __name__ == "__main__":
    key = jax.random.PRNGKey(0)
    ks = jax.random.split(key, 11)

    # BatchNorm #0 (over in_channels) — running stats + affine
    g0 = jax.random.uniform(ks[0], (C,), jnp.float32, 0.5, 1.5)
    be0 = 0.1 * jax.random.normal(ks[1], (C,), jnp.float32)
    m0 = 0.1 * jax.random.normal(ks[2], (C,), jnp.float32)
    v0 = jax.random.uniform(ks[3], (C,), jnp.float32, 0.5, 1.5)
    # Conv #1: 3x3, in->out, stride 1, bias=False (HWIO layout)
    w1 = 0.1 * jax.random.normal(ks[4], (KH, KW, C, C), jnp.float32)
    # BatchNorm #1 (over out_channels)
    g1 = jax.random.uniform(ks[5], (C,), jnp.float32, 0.5, 1.5)
    be1 = 0.1 * jax.random.normal(ks[6], (C,), jnp.float32)
    m1 = 0.1 * jax.random.normal(ks[7], (C,), jnp.float32)
    v1 = jax.random.uniform(ks[8], (C,), jnp.float32, 0.5, 1.5)
    # Conv #2: 3x3, in->out, stride 1, bias=False
    w2 = 0.1 * jax.random.normal(ks[9], (KH, KW, C, C), jnp.float32)

    # One-time parameter prep (BN folding + im2col weight packing).
    params = prepare_params(g0, be0, m0, v0, w1, g1, be1, m1, v1, w2)
    params = jax.tree_util.tree_map(jax.block_until_ready, params)

    # Input in PyTorch's NCHW convention.
    x_nchw = jax.random.normal(ks[10], (N, C, H, W), jnp.float32)

    out_nchw = residual_block_pallas(x_nchw, params)
    out_nchw = jax.block_until_ready(out_nchw)

    x_nhwc = jnp.transpose(x_nchw, (0, 2, 3, 1))
    ref_nchw = jnp.transpose(
        residual_block_ref(x_nhwc, (g0, be0, m0, v0, w1, g1, be1, m1, v1, w2)),
        (0, 3, 1, 2))

    err = float(jnp.max(jnp.abs(out_nchw - ref_nchw)))
    assert jnp.allclose(out_nchw, ref_nchw, atol=1e-4, rtol=1e-4), err
    print("KERNEL_OK")
</pallas_src>

<mosaic_0001>
module attributes {stable_mosaic.version = 11 : i64} {
  func.func @_residual_kernel(%arg0: memref<4x512xf32, #tpu.memory_space<vmem>>, %arg1: memref<4x1xf32, #tpu.memory_space<vmem>>, %arg2: memref<4x1xf32, #tpu.memory_space<vmem>>, %arg3: memref<4x40xf32, #tpu.memory_space<vmem>>, %arg4: memref<4x1xf32, #tpu.memory_space<vmem>>, %arg5: memref<4x1xf32, #tpu.memory_space<vmem>>, %arg6: memref<4x40xf32, #tpu.memory_space<vmem>>, %arg7: memref<9x512xf32, #tpu.memory_space<vmem>>, %arg8: memref<4x512xf32, #tpu.memory_space<vmem>>, %arg9: memref<40x512xf32, #tpu.memory_space<vmem>>) attributes {dimension_semantics = [], scalar_prefetch = 0 : i64, scratch_operands = 1 : i64, tpu.core_type = #tpu.core_type<tc>} {
    %c0 = arith.constant 0 : index
    %c0_0 = arith.constant 0 : index
    %0 = vector.load %arg0[%c0, %c0_0] : memref<4x512xf32, #tpu.memory_space<vmem>>, vector<4x512xf32>
    %cst = arith.constant 0.000000e+00 : f32
    %1 = vector.broadcast %cst : f32 to vector<4x512xf32>
    %c0_1 = arith.constant 0 : index
    %c0_2 = arith.constant 0 : index
    %2 = vector.load %arg1[%c0_1, %c0_2] : memref<4x1xf32, #tpu.memory_space<vmem>>, vector<4x1xf32>
    %3 = vector.broadcast %2 : vector<4x1xf32> to vector<4x512xf32>
    %4 = arith.mulf %0, %3 : vector<4x512xf32>
    %c0_3 = arith.constant 0 : index
    %c0_4 = arith.constant 0 : index
    %5 = vector.load %arg2[%c0_3, %c0_4] : memref<4x1xf32, #tpu.memory_space<vmem>>, vector<4x1xf32>
    %6 = vector.broadcast %5 : vector<4x1xf32> to vector<4x512xf32>
    %7 = arith.addf %4, %6 : vector<4x512xf32>
    %c17_i32 = arith.constant 17 : i32
    %8 = tpu.dynamic_rotate %7 by %c17_i32 dim 1 : vector<4x512xf32>, i32 -> vector<4x512xf32>
    %c0_5 = arith.constant 0 : index
    %c0_6 = arith.constant 0 : index
    %9 = vector.load %arg7[%c0_5, %c0_6] : memref<9x512xf32, #tpu.memory_space<vmem>>, vector<1x512xf32>
    %10 = vector.broadcast %9 : vector<1x512xf32> to vector<4x512xf32>
    %11 = arith.mulf %8, %10 : vector<4x512xf32>
    %c16_i32 = arith.constant 16 : i32
    %12 = tpu.dynamic_rotate %7 by %c16_i32 dim 1 : vector<4x512xf32>, i32 -> vector<4x512xf32>
    %c1 = arith.constant 1 : index
    %c0_7 = arith.constant 0 : index
    %13 = vector.load %arg7[%c1, %c0_7] : memref<9x512xf32, #tpu.memory_space<vmem>>, vector<1x512xf32>
    %14 = vector.broadcast %13 : vector<1x512xf32> to vector<4x512xf32>
    %15 = arith.mulf %12, %14 : vector<4x512xf32>
    %16 = tpu.concatenate %11, %15 in 0 : vector<4x512xf32>, vector<4x512xf32> -> vector<8x512xf32>
    %c0_8 = arith.constant 0 : index
    %c0_9 = arith.constant 0 : index
    %17 = vector.load %arg9[%c0_8, %c0_9] : memref<40x512xf32, #tpu.memory_space<vmem>>, vector<8x512xf32>
    tpu.vector_store %arg9[%c0_8, %c0_9], %16 {strides = array<i32>} : memref<40x512xf32, #tpu.memory_space<vmem>>, vector<8x512xf32>,
    %c15_i32 = arith.constant 15 : i32
    %18 = tpu.dynamic_rotate %7 by %c15_i32 dim 1 : vector<4x512xf32>, i32 -> vector<4x512xf32>
    %c2 = arith.constant 2 : index
    %c0_10 = arith.constant 0 : index
    %19 = vector.load %arg7[%c2, %c0_10] : memref<9x512xf32, #tpu.memory_space<vmem>>, vector<1x512xf32>
    %20 = vector.broadcast %19 : vector<1x512xf32> to vector<4x512xf32>
    %21 = arith.mulf %18, %20 : vector<4x512xf32>
    %c1_i32 = arith.constant 1 : i32
    %22 = tpu.dynamic_rotate %7 by %c1_i32 dim 1 : vector<4x512xf32>, i32 -> vector<4x512xf32>
    %c3 = arith.constant 3 : index
    %c0_11 = arith.constant 0 : index
    %23 = vector.load %arg7[%c3, %c0_11] : memref<9x512xf32, #tpu.memory_space<vmem>>, vector<1x512xf32>
    %24 = vector.broadcast %23 : vector<1x512xf32> to vector<4x512xf32>
    %25 = arith.mulf %22, %24 : vector<4x512xf32>
    %26 = tpu.concatenate %21, %25 in 0 : vector<4x512xf32>, vector<4x512xf32> -> vector<8x512xf32>
    %c8 = arith.constant 8 : index
    %c0_12 = arith.constant 0 : index
    %27 = vector.load %arg9[%c8, %c0_12] : memref<40x512xf32, #tpu.memory_space<vmem>>, vector<8x512xf32>
    tpu.vector_store %arg9[%c8, %c0_12], %26 {strides = array<i32>} : memref<40x512xf32, #tpu.memory_space<vmem>>, vector<8x512xf32>,
    %c511_i32 = arith.constant 511 : i32
    %28 = tpu.dynamic_rotate %7 by %c511_i32 dim 1 : vector<4x512xf32>, i32 -> vector<4x512xf32>
    %c5 = arith.constant 5 : index
    %c0_13 = arith.constant 0 : index
    %29 = vector.load %arg7[%c5, %c0_13] : memref<9x512xf32, #tpu.memory_space<vmem>>, vector<1x512xf32>
    %30 = vector.broadcast %29 : vector<1x512xf32> to vector<4x512xf32>
    %31 = arith.mulf %28, %30 : vector<4x512xf32>
    %32 = tpu.concatenate %7, %31 in 0 : vector<4x512xf32>, vector<4x512xf32> -> vector<8x512xf32>
    %c16 = arith.constant 16 : index
    %c0_14 = arith.constant 0 : index
    %33 = vector.load %arg9[%c16, %c0_14] : memref<40x512xf32, #tpu.memory_space<vmem>>, vector<8x512xf32>
    tpu.vector_store %arg9[%c16, %c0_14], %32 {strides = array<i32>} : memref<40x512xf32, #tpu.memory_space<vmem>>, vector<8x512xf32>,
    %c497_i32 = arith.constant 497 : i32
    %34 = tpu.dynamic_rotate %7 by %c497_i32 dim 1 : vector<4x512xf32>, i32 -> vector<4x512xf32>
    %c6 = arith.constant 6 : index
    %c0_15 = arith.constant 0 : index
    %35 = vector.load %arg7[%c6, %c0_15] : memref<9x512xf32, #tpu.memory_space<vmem>>, vector<1x512xf32>
    %36 = vector.broadcast %35 : vector<1x512xf32> to vector<4x512xf32>
    %37 = arith.mulf %34, %36 : vector<4x512xf32>
    %c496_i32 = arith.constant 496 : i32
    %38 = tpu.dynamic_rotate %7 by %c496_i32 dim 1 : vector<4x512xf32>, i32 -> vector<4x512xf32>
    %c7 = arith.constant 7 : index
    %c0_16 = arith.constant 0 : index
    %39 = vector.load %arg7[%c7, %c0_16] : memref<9x512xf32, #tpu.memory_space<vmem>>, vector<1x512xf32>
    %40 = vector.broadcast %39 : vector<1x512xf32> to vector<4x512xf32>
    %41 = arith.mulf %38, %40 : vector<4x512xf32>
    %42 = tpu.concatenate %37, %41 in 0 : vector<4x512xf32>, vector<4x512xf32> -> vector<8x512xf32>
    %c24 = arith.constant 24 : index
    %c0_17 = arith.constant 0 : index
    %43 = vector.load %arg9[%c24, %c0_17] : memref<40x512xf32, #tpu.memory_space<vmem>>, vector<8x512xf32>
    tpu.vector_store %arg9[%c24, %c0_17], %42 {strides = array<i32>} : memref<40x512xf32, #tpu.memory_space<vmem>>, vector<8x512xf32>,
    %c495_i32 = arith.constant 495 : i32
    %44 = tpu.dynamic_rotate %7 by %c495_i32 dim 1 : vector<4x512xf32>, i32 -> vector<4x512xf32>
    %c8_18 = arith.constant 8 : index
    %c0_19 = arith.constant 0 : index
    %45 = vector.load %arg7[%c8_18, %c0_19] : memref<9x512xf32, #tpu.memory_space<vmem>>, vector<1x512xf32>
    %46 = vector.broadcast %45 : vector<1x512xf32> to vector<4x512xf32>
    %47 = arith.mulf %44, %46 : vector<4x512xf32>
    %48 = tpu.concatenate %47, %1 in 0 : vector<4x512xf32>, vector<4x512xf32> -> vector<8x512xf32>
    %c32 = arith.constant 32 : index
    %c0_20 = arith.constant 0 : index
    %49 = vector.load %arg9[%c32, %c0_20] : memref<40x512xf32, #tpu.memory_space<vmem>>, vector<8x512xf32>
    tpu.vector_store %arg9[%c32, %c0_20], %48 {strides = array<i32>} : memref<40x512xf32, #tpu.memory_space<vmem>>, vector<8x512xf32>,
    %c0_21 = arith.constant 0 : index
    %c0_22 = arith.constant 0 : index
    %50 = vector.load %arg3[%c0_21, %c0_22] : memref<4x40xf32, #tpu.memory_space<vmem>>, vector<4x40xf32>
    %c0_23 = arith.constant 0 : index
    %c0_24 = arith.constant 0 : index
    %51 = vector.load %arg9[%c0_23, %c0_24] : memref<40x512xf32, #tpu.memory_space<vmem>>, vector<40x512xf32>
    %cst_25 = arith.constant dense<0.000000e+00> : vector<4x512xf32>
    %52 = tpu.matmul %50, %51, %cst_25 {dimension_numbers = #tpu.dot_dimension_numbers<[1], [0], [0], [1], [0, 0, 1, 1], [], []>} : vector<4x40xf32>, vector<40x512xf32>, vector<4x512xf32> -> vector<4x512xf32>
    %c0_26 = arith.constant 0 : index
    %c0_27 = arith.constant 0 : index
    %53 = vector.load %arg4[%c0_26, %c0_27] : memref<4x1xf32, #tpu.memory_space<vmem>>, vector<4x1xf32>
    %54 = vector.broadcast %53 : vector<4x1xf32> to vector<4x512xf32>
    %55 = arith.mulf %52, %54 : vector<4x512xf32>
    %c0_28 = arith.constant 0 : index
    %c0_29 = arith.constant 0 : index
    %56 = vector.load %arg5[%c0_28, %c0_29] : memref<4x1xf32, #tpu.memory_space<vmem>>, vector<4x1xf32>
    %57 = vector.broadcast %56 : vector<4x1xf32> to vector<4x512xf32>
    %58 = arith.addf %55, %57 : vector<4x512xf32>
    %cst_30 = arith.constant 0.000000e+00 : f32
    %59 = vector.broadcast %cst_30 : f32 to vector<4x512xf32>
    %60 = arith.maximumf %58, %59 : vector<4x512xf32>
    %c17_i32_31 = arith.constant 17 : i32
    %61 = tpu.dynamic_rotate %60 by %c17_i32_31 dim 1 : vector<4x512xf32>, i32 -> vector<4x512xf32>
    %c0_32 = arith.constant 0 : index
    %c0_33 = arith.constant 0 : index
    %62 = vector.load %arg7[%c0_32, %c0_33] : memref<9x512xf32, #tpu.memory_space<vmem>>, vector<1x512xf32>
    %63 = vector.broadcast %62 : vector<1x512xf32> to vector<4x512xf32>
    %64 = arith.mulf %61, %63 : vector<4x512xf32>
    %c16_i32_34 = arith.constant 16 : i32
    %65 = tpu.dynamic_rotate %60 by %c16_i32_34 dim 1 : vector<4x512xf32>, i32 -> vector<4x512xf32>
    %c1_35 = arith.constant 1 : index
    %c0_36 = arith.constant 0 : index
    %66 = vector.load %arg7[%c1_35, %c0_36] : memref<9x512xf32, #tpu.memory_space<vmem>>, vector<1x512xf32>
    %67 = vector.broadcast %66 : vector<1x512xf32> to vector<4x512xf32>
    %68 = arith.mulf %65, %67 : vector<4x512xf32>
    %69 = tpu.concatenate %64, %68 in 0 : vector<4x512xf32>, vector<4x512xf32> -> vector<8x512xf32>
    %c0_37 = arith.constant 0 : index
    %c0_38 = arith.constant 0 : index
    %70 = vector.load %arg9[%c0_37, %c0_38] : memref<40x512xf32, #tpu.memory_space<vmem>>, vector<8x512xf32>
    tpu.vector_store %arg9[%c0_37, %c0_38], %69 {strides = array<i32>} : memref<40x512xf32, #tpu.memory_space<vmem>>, vector<8x512xf32>,
    %c15_i32_39 = arith.constant 15 : i32
    %71 = tpu.dynamic_rotate %60 by %c15_i32_39 dim 1 : vector<4x512xf32>, i32 -> vector<4x512xf32>
    %c2_40 = arith.constant 2 : index
    %c0_41 = arith.constant 0 : index
    %72 = vector.load %arg7[%c2_40, %c0_41] : memref<9x512xf32, #tpu.memory_space<vmem>>, vector<1x512xf32>
    %73 = vector.broadcast %72 : vector<1x512xf32> to vector<4x512xf32>
    %74 = arith.mulf %71, %73 : vector<4x512xf32>
    %c1_i32_42 = arith.constant 1 : i32
    %75 = tpu.dynamic_rotate %60 by %c1_i32_42 dim 1 : vector<4x512xf32>, i32 -> vector<4x512xf32>
    %c3_43 = arith.constant 3 : index
    %c0_44 = arith.constant 0 : index
    %76 = vector.load %arg7[%c3_43, %c0_44] : memref<9x512xf32, #tpu.memory_space<vmem>>, vector<1x512xf32>
    %77 = vector.broadcast %76 : vector<1x512xf32> to vector<4x512xf32>
    %78 = arith.mulf %75, %77 : vector<4x512xf32>
    %79 = tpu.concatenate %74, %78 in 0 : vector<4x512xf32>, vector<4x512xf32> -> vector<8x512xf32>
    %c8_45 = arith.constant 8 : index
    %c0_46 = arith.constant 0 : index
    %80 = vector.load %arg9[%c8_45, %c0_46] : memref<40x512xf32, #tpu.memory_space<vmem>>, vector<8x512xf32>
    tpu.vector_store %arg9[%c8_45, %c0_46], %79 {strides = array<i32>} : memref<40x512xf32, #tpu.memory_space<vmem>>, vector<8x512xf32>,
    %c511_i32_47 = arith.constant 511 : i32
    %81 = tpu.dynamic_rotate %60 by %c511_i32_47 dim 1 : vector<4x512xf32>, i32 -> vector<4x512xf32>
    %c5_48 = arith.constant 5 : index
    %c0_49 = arith.constant 0 : index
    %82 = vector.load %arg7[%c5_48, %c0_49] : memref<9x512xf32, #tpu.memory_space<vmem>>, vector<1x512xf32>
    %83 = vector.broadcast %82 : vector<1x512xf32> to vector<4x512xf32>
    %84 = arith.mulf %81, %83 : vector<4x512xf32>
    %85 = tpu.concatenate %60, %84 in 0 : vector<4x512xf32>, vector<4x512xf32> -> vector<8x512xf32>
    %c16_50 = arith.constant 16 : index
    %c0_51 = arith.constant 0 : index
    %86 = vector.load %arg9[%c16_50, %c0_51] : memref<40x512xf32, #tpu.memory_space<vmem>>, vector<8x512xf32>
    tpu.vector_store %arg9[%c16_50, %c0_51], %85 {strides = array<i32>} : memref<40x512xf32, #tpu.memory_space<vmem>>, vector<8x512xf32>,
    %c497_i32_52 = arith.constant 497 : i32
    %87 = tpu.dynamic_rotate %60 by %c497_i32_52 dim 1 : vector<4x512xf32>, i32 -> vector<4x512xf32>
    %c6_53 = arith.constant 6 : index
    %c0_54 = arith.constant 0 : index
    %88 = vector.load %arg7[%c6_53, %c0_54] : memref<9x512xf32, #tpu.memory_space<vmem>>, vector<1x512xf32>
    %89 = vector.broadcast %88 : vector<1x512xf32> to vector<4x512xf32>
    %90 = arith.mulf %87, %89 : vector<4x512xf32>
    %c496_i32_55 = arith.constant 496 : i32
    %91 = tpu.dynamic_rotate %60 by %c496_i32_55 dim 1 : vector<4x512xf32>, i32 -> vector<4x512xf32>
    %c7_56 = arith.constant 7 : index
    %c0_57 = arith.constant 0 : index
    %92 = vector.load %arg7[%c7_56, %c0_57] : memref<9x512xf32, #tpu.memory_space<vmem>>, vector<1x512xf32>
    %93 = vector.broadcast %92 : vector<1x512xf32> to vector<4x512xf32>
    %94 = arith.mulf %91, %93 : vector<4x512xf32>
    %95 = tpu.concatenate %90, %94 in 0 : vector<4x512xf32>, vector<4x512xf32> -> vector<8x512xf32>
    %c24_58 = arith.constant 24 : index
    %c0_59 = arith.constant 0 : index
    %96 = vector.load %arg9[%c24_58, %c0_59] : memref<40x512xf32, #tpu.memory_space<vmem>>, vector<8x512xf32>
    tpu.vector_store %arg9[%c24_58, %c0_59], %95 {strides = array<i32>} : memref<40x512xf32, #tpu.memory_space<vmem>>, vector<8x512xf32>,
    %c495_i32_60 = arith.constant 495 : i32
    %97 = tpu.dynamic_rotate %60 by %c495_i32_60 dim 1 : vector<4x512xf32>, i32 -> vector<4x512xf32>
    %c8_61 = arith.constant 8 : index
    %c0_62 = arith.constant 0 : index
    %98 = vector.load %arg7[%c8_61, %c0_62] : memref<9x512xf32, #tpu.memory_space<vmem>>, vector<1x512xf32>
    %99 = vector.broadcast %98 : vector<1x512xf32> to vector<4x512xf32>
    %100 = arith.mulf %97, %99 : vector<4x512xf32>
    %101 = tpu.concatenate %100, %1 in 0 : vector<4x512xf32>, vector<4x512xf32> -> vector<8x512xf32>
    %c32_63 = arith.constant 32 : index
    %c0_64 = arith.constant 0 : index
    %102 = vector.load %arg9[%c32_63, %c0_64] : memref<40x512xf32, #tpu.memory_space<vmem>>, vector<8x512xf32>
    tpu.vector_store %arg9[%c32_63, %c0_64], %101 {strides = array<i32>} : memref<40x512xf32, #tpu.memory_space<vmem>>, vector<8x512xf32>,
    %c0_65 = arith.constant 0 : index
    %c0_66 = arith.constant 0 : index
    %103 = vector.load %arg6[%c0_65, %c0_66] : memref<4x40xf32, #tpu.memory_space<vmem>>, vector<4x40xf32>
    %c0_67 = arith.constant 0 : index
    %c0_68 = arith.constant 0 : index
    %104 = vector.load %arg9[%c0_67, %c0_68] : memref<40x512xf32, #tpu.memory_space<vmem>>, vector<40x512xf32>
    %cst_69 = arith.constant dense<0.000000e+00> : vector<4x512xf32>
    %105 = tpu.matmul %103, %104, %cst_69 {dimension_numbers = #tpu.dot_dimension_numbers<[1], [0], [0], [1], [0, 0, 1, 1], [], []>} : vector<4x40xf32>, vector<40x512xf32>, vector<4x512xf32> -> vector<4x512xf32>
    %106 = arith.addf %105, %0 : vector<4x512xf32>
    %c0_70 = arith.constant 0 : index
    %c0_71 = arith.constant 0 : index
    %107 = vector.load %arg8[%c0_70, %c0_71] : memref<4x512xf32, #tpu.memory_space<vmem>>, vector<4x512xf32>
    tpu.vector_store %arg8[%c0_70, %c0_71], %106 {strides = array<i32>} : memref<4x512xf32, #tpu.memory_space<vmem>>, vector<4x512xf32>,
    return
  }
}

</mosaic_0001>

<llo_original>
// kernel: residual_block_pallas.1
$region0: #{residual_block_pallas.1}
  #allocation0 [shape = 'u32[]', space=smem, size = 0x4, offset = 0x4, fixed_abs, tag = 'smem constant byte address 0x4 - core index']
  #allocation1 [shape = 'u32[144,128]{1,0:T(1,128)}', space=vmem, size = 0x12000, scoped, tag = 'internal scratch']
  #allocation2 [shape = 'f32[40,512]{1,0:T(8,128)}', space=vmem, size = 0x14000, scoped, tag = 'scratch operand']
  %s0 = inlined_call_operand.vmem [shape: f32[4,512], index: 0, kind: input, shape index: {}]
  %s1 = inlined_call_operand.vmem [shape: f32[4,1], index: 1, kind: input, shape index: {}]
  %s2 = inlined_call_operand.vmem [shape: f32[4,1], index: 2, kind: input, shape index: {}]
  %s3 = inlined_call_operand.vmem [shape: f32[4,40], index: 3, kind: input, shape index: {}]
  %s4 = inlined_call_operand.vmem [shape: f32[4,1], index: 4, kind: input, shape index: {}]
  %s5 = inlined_call_operand.vmem [shape: f32[4,1], index: 5, kind: input, shape index: {}]
  %s6 = inlined_call_operand.vmem [shape: f32[4,40], index: 6, kind: input, shape index: {}]
  %s7 = inlined_call_operand.vmem [shape: f32[9,512], index: 7, kind: input, shape index: {}]
  %s8 = inlined_call_operand.vmem [shape: f32[4,512], index: 8, kind: output, shape index: {}]
  %s9 = sld [smem:[#allocation0]]
  $region42: #{residual_block_pallas.1} parent=0
    _
  %s11 = ssub.s32 1, %s9
  %s12 = scalar_select 0, %s11, %s9
  // Predicated region
  $region2: #{residual_block_pallas.1} parent=0 // pred_check
    _
  $region3: #{residual_block_pallas.1} parent=0 // pred_check_branch
    %14 = sbr.rel (0) target = $region5
  $region4: #{residual_block_pallas.1} parent=0 // pred_region
    _
  $region5: #{residual_block_pallas.1} parent=0 // pred_fallthru
    _
  // Predicated region
  $region6: #{residual_block_pallas.1} parent=0 // pred_check
    _
  $region7: #{residual_block_pallas.1} parent=0 // pred_check_branch
    %16 = sbr.rel (0) target = $region9
  $region8: #{residual_block_pallas.1} parent=0 // pred_region
    _
  $region9: #{residual_block_pallas.1} parent=0 // pred_fallthru
    _
  // Predicated region
  $region10: #{residual_block_pallas.1} parent=0 // pred_check
    _
  $region11: #{residual_block_pallas.1} parent=0 // pred_check_branch
    %18 = sbr.rel (0) target = $region13
  $region12: #{residual_block_pallas.1} parent=0 // pred_region
    _
  $region13: #{residual_block_pallas.1} parent=0 // pred_fallthru
    _
  // Predicated region
  $region14: #{residual_block_pallas.1} parent=0 // pred_check
    _
  $region15: #{residual_block_pallas.1} parent=0 // pred_check_branch
    %20 = sbr.rel (0) target = $region17
  $region16: #{residual_block_pallas.1} parent=0 // pred_region
    _
  $region17: #{residual_block_pallas.1} parent=0 // pred_fallthru
    _
  // Predicated region
  $region18: #{residual_block_pallas.1} parent=0 // pred_check
    _
  $region19: #{residual_block_pallas.1} parent=0 // pred_check_branch
    %22 = sbr.rel (0) target = $region21
  $region20: #{residual_block_pallas.1} parent=0 // pred_region
    _
  $region21: #{residual_block_pallas.1} parent=0 // pred_fallthru
    _
  // Predicated region
  $region22: #{residual_block_pallas.1} parent=0 // pred_check
    _
  $region23: #{residual_block_pallas.1} parent=0 // pred_check_branch
    %24 = sbr.rel (0) target = $region25
  $region24: #{residual_block_pallas.1} parent=0 // pred_region
    _
  $region25: #{residual_block_pallas.1} parent=0 // pred_fallthru
    _
  // Predicated region
  $region26: #{residual_block_pallas.1} parent=0 // pred_check
    _
  $region27: #{residual_block_pallas.1} parent=0 // pred_check_branch
    %26 = sbr.rel (0) target = $region29
  $region28: #{residual_block_pallas.1} parent=0 // pred_region
    _
  $region29: #{residual_block_pallas.1} parent=0 // pred_fallthru
    _
  // Predicated region
  $region30: #{residual_block_pallas.1} parent=0 // pred_check
    _
  $region31: #{residual_block_pallas.1} parent=0 // pred_check_branch
    %28 = sbr.rel (0) target = $region33
  $region32: #{residual_block_pallas.1} parent=0 // pred_region
    _
  $region33: #{residual_block_pallas.1} parent=0 // pred_fallthru
    _
  %v29 = vld [vmem:[%s0] sm:$0xff]
  %v30 = vld [vmem:[%s0 + $0x8] sm:$0xff]
  %v31 = vld [vmem:[%s1] sm:$0xf]
  %33 = vset.pattern.permute.xlu0 0
  %34 = vperm.xlu0 %33, %v31
  %v35 = vpop.permute.xlu0 %34
  %v37 = vunpack.c.l.s4 839922192
  %v38 = vunpack.c.0.s8 %v37
  %v39 = vlaneseq
  %v40 = vshrl.u32 %v39, 7
  %v41 = vsub.s32 %v38, %v40
  %v42 = vrot.slane %v35, %v41
  %v44 = vmul.f32 %v29, %v42
  %v45 = vmul.f32 %v30, %v42
  %v46 = vld [vmem:[%s2] sm:$0xf]
  %48 = vset.pattern.permute.xlu0 0
  %49 = vperm.xlu0 %48, %v46
  %v50 = vpop.permute.xlu0 %49
  %v52 = vunpack.c.l.s4 839922192
  %v53 = vunpack.c.0.s8 %v52
  %v54 = vlaneseq
  %v55 = vshrl.u32 %v54, 7
  %v56 = vsub.s32 %v53, %v55
  %v57 = vrot.slane %v50, %v56
  %v59 = vadd.f32 %v44, %v57
  %v60 = vadd.f32 %v45, %v57
  %v63 = vcombine.high %v59, %v59
  %v64 = vcombine.high %v60, %v60
  %67 = vrot.lane.b32.xlu0 %v59, 17
  %v68 = vpop.permute.xlu0 %67
  %69 = vrot.lane.b32.xlu0 %v63, 17
  %v70 = vpop.permute.xlu0 %69
  %71 = vrot.lane.b32.xlu0 %v60, 17
  %v72 = vpop.permute.xlu0 %71
  %73 = vrot.lane.b32.xlu0 %v64, 17
  %v74 = vpop.permute.xlu0 %73
  %v75 = vlaneseq
  %v76 = vand.u32 %v75, 127
  %vm77 = vcmp.lt.s32.totalorder %v76, 17
  %v78 = vsel %vm77, %v72, %v74
  %v79 = vsel %vm77, %v70, %v72
  %v80 = vsel %vm77, %v68, %v70
  %v81 = vsel %vm77, %v74, %v68
  %v82 = vld [vmem:[%s7] ss:$8 sm:$0xf]
  %v84 = vlaneseq
  %v85 = vshrl.u32 %v84, 7
  %v86 = vsub.s32 0, %v85
  %v87 = vrot.slane %v82, %v86
  %v88 = vlaneseq
  %v89 = vshrl.u32 %v88, 7
  %v90 = vsub.s32 1, %v89
  %v91 = vrot.slane %v82, %v90
  %v92 = vlaneseq
  %v93 = vshrl.u32 %v92, 7
  %v94 = vsub.s32 2, %v93
  %v95 = vrot.slane %v82, %v94
  %v96 = vlaneseq
  %v97 = vshrl.u32 %v96, 7
  %v98 = vsub.s32 3, %v97
  %v99 = vrot.slane %v82, %v98
  %v104 = vmul.f32 %v81, %v87
  %v105 = vmul.f32 %v80, %v91
  %v106 = vmul.f32 %v79, %v95
  %v107 = vmul.f32 %v78, %v99
  %108 = vrot.lane.b32.xlu0 %v59, 16
  %v109 = vpop.permute.xlu0 %108
  %110 = vrot.lane.b32.xlu0 %v63, 16
  %v111 = vpop.permute.xlu0 %110
  %112 = vrot.lane.b32.xlu0 %v60, 16
  %v113 = vpop.permute.xlu0 %112
  %114 = vrot.lane.b32.xlu0 %v64, 16
  %v115 = vpop.permute.xlu0 %114
  %vm116 = vcmp.lt.s32.totalorder %v76, 16
  %v117 = vsel %vm116, %v113, %v115
  %v118 = vsel %vm116, %v111, %v113
  %v119 = vsel %vm116, %v109, %v111
  %v120 = vsel %vm116, %v115, %v109
  %s121 = scalar_lea.vmem %s7, 1
  %v122 = vld [vmem:[%s121] ss:$8 sm:$0xf]
  %v124 = vlaneseq
  %v125 = vshrl.u32 %v124, 7
  %v126 = vsub.s32 0, %v125
  %v127 = vrot.slane %v122, %v126
  %v128 = vlaneseq
  %v129 = vshrl.u32 %v128, 7
  %v130 = vsub.s32 1, %v129
  %v131 = vrot.slane %v122, %v130
  %v132 = vlaneseq
  %v133 = vshrl.u32 %v132, 7
  %v134 = vsub.s32 2, %v133
  %v135 = vrot.slane %v122, %v134
  %v136 = vlaneseq
  %v137 = vshrl.u32 %v136, 7
  %v138 = vsub.s32 3, %v137
  %v139 = vrot.slane %v122, %v138
  %v144 = vmul.f32 %v120, %v127
  %v145 = vmul.f32 %v119, %v131
  %v146 = vmul.f32 %v118, %v135
  %v147 = vmul.f32 %v117, %v139
  %v152 = vrot.slane %v144, 4
  %v153 = vrot.slane %v145, 4
  %v154 = vrot.slane %v146, 4
  %v155 = vrot.slane %v147, 4
  %vm160 = vcmask 1043456
  %v161 = vsel %vm160, %v104, %v152
  %v162 = vsel %vm160, %v105, %v153
  %v163 = vsel %vm160, %v106, %v154
  %v164 = vsel %vm160, %v107, %v155
  %165 = vst [vmem:[#allocation2] sm:$0xff] %v161
  %166 = vst [vmem:[#allocation2 + $0x8] sm:$0xff] %v162
  %167 = vst [vmem:[#allocation2 + $0x10] sm:$0xff] %v163
  %168 = vst [vmem:[#allocation2 + $0x18] sm:$0xff] %v164
  %169 = vrot.lane.b32.xlu0 %v59, 15
  %v170 = vpop.permute.xlu0 %169
  %171 = vrot.lane.b32.xlu0 %v63, 15
  %v172 = vpop.permute.xlu0 %171
  %173 = vrot.lane.b32.xlu0 %v60, 15
  %v174 = vpop.permute.xlu0 %173
  %175 = vrot.lane.b32.xlu0 %v64, 15
  %v176 = vpop.permute.xlu0 %175
  %vm177 = vcmp.lt.s32.totalorder %v76, 15
  %v178 = vsel %vm177, %v174, %v176
  %v179 = vsel %vm177, %v172, %v174
  %v180 = vsel %vm177, %v170, %v172
  %v181 = vsel %vm177, %v176, %v170
  %s182 = scalar_lea.vmem %s7, 2
  %v183 = vld [vmem:[%s182] ss:$8 sm:$0xf]
  %v185 = vlaneseq
  %v186 = vshrl.u32 %v185, 7
  %v187 = vsub.s32 0, %v186
  %v188 = vrot.slane %v183, %v187
  %v189 = vlaneseq
  %v190 = vshrl.u32 %v189, 7
  %v191 = vsub.s32 1, %v190
  %v192 = vrot.slane %v183, %v191
  %v193 = vlaneseq
  %v194 = vshrl.u32 %v193, 7
  %v195 = vsub.s32 2, %v194
  %v196 = vrot.slane %v183, %v195
  %v197 = vlaneseq
  %v198 = vshrl.u32 %v197, 7
  %v199 = vsub.s32 3, %v198
  %v200 = vrot.slane %v183, %v199
  %v205 = vmul.f32 %v181, %v188
  %v206 = vmul.f32 %v180, %v192
  %v207 = vmul.f32 %v179, %v196
  %v208 = vmul.f32 %v178, %v200
  %209 = vrot.lane.b32.xlu0 %v59, 1
  %v210 = vpop.permute.xlu0 %209
  %211 = vrot.lane.b32.xlu0 %v63, 1
  %v212 = vpop.permute.xlu0 %211
  %213 = vrot.lane.b32.xlu0 %v60, 1
  %v214 = vpop.permute.xlu0 %213
  %215 = vrot.lane.b32.xlu0 %v64, 1
  %v216 = vpop.permute.xlu0 %215
  %vm217 = vcmp.lt.s32.totalorder %v76, 1
  %v218 = vsel %vm217, %v214, %v216
  %v219 = vsel %vm217, %v212, %v214
  %v220 = vsel %vm217, %v210, %v212
  %v221 = vsel %vm217, %v216, %v210
  %s222 = scalar_lea.vmem %s7, 3
  %v223 = vld [vmem:[%s222] ss:$8 sm:$0xf]
  %v225 = vlaneseq
  %v226 = vshrl.u32 %v225, 7
  %v227 = vsub.s32 0, %v226
  %v228 = vrot.slane %v223, %v227
  %v229 = vlaneseq
  %v230 = vshrl.u32 %v229, 7
  %v231 = vsub.s32 1, %v230
  %v232 = vrot.slane %v223, %v231
  %v233 = vlaneseq
  %v234 = vshrl.u32 %v233, 7
  %v235 = vsub.s32 2, %v234
  %v236 = vrot.slane %v223, %v235
  %v237 = vlaneseq
  %v238 = vshrl.u32 %v237, 7
  %v239 = vsub.s32 3, %v238
  %v240 = vrot.slane %v223, %v239
  %v245 = vmul.f32 %v221, %v228
  %v246 = vmul.f32 %v220, %v232
  %v247 = vmul.f32 %v219, %v236
  %v248 = vmul.f32 %v218, %v240
  %v253 = vrot.slane %v245, 4
  %v254 = vrot.slane %v246, 4
  %v255 = vrot.slane %v247, 4
  %v256 = vrot.slane %v248, 4
  %v261 = vsel %vm160, %v205, %v253
  %v262 = vsel %vm160, %v206, %v254
  %v263 = vsel %vm160, %v207, %v255
  %v264 = vsel %vm160, %v208, %v256
  %265 = vst [vmem:[#allocation2 + $0x20] sm:$0xff] %v261
  %266 = vst [vmem:[#allocation2 + $0x28] sm:$0xff] %v262
  %267 = vst [vmem:[#allocation2 + $0x30] sm:$0xff] %v263
  %268 = vst [vmem:[#allocation2 + $0x38] sm:$0xff] %v264
  %269 = vrot.lane.b32.xlu0 %v59, 127
  %v270 = vpop.permute.xlu0 %269
  %271 = vrot.lane.b32.xlu0 %v63, 127
  %v272 = vpop.permute.xlu0 %271
  %273 = vrot.lane.b32.xlu0 %v60, 127
  %v274 = vpop.permute.xlu0 %273
  %275 = vrot.lane.b32.xlu0 %v64, 127
  %v276 = vpop.permute.xlu0 %275
  %vm277 = vcmp.lt.s32.totalorder %v76, 127
  %v278 = vsel %vm277, %v274, %v276
  %v279 = vsel %vm277, %v272, %v274
  %v280 = vsel %vm277, %v270, %v272
  %v281 = vsel %vm277, %v276, %v270
  %s282 = scalar_lea.vmem %s7, 5
  %v283 = vld [vmem:[%s282] ss:$8 sm:$0xf]
  %v285 = vlaneseq
  %v286 = vshrl.u32 %v285, 7
  %v287 = vsub.s32 0, %v286
  %v288 = vrot.slane %v283, %v287
  %v289 = vlaneseq
  %v290 = vshrl.u32 %v289, 7
  %v291 = vsub.s32 1, %v290
  %v292 = vrot.slane %v283, %v291
  %v293 = vlaneseq
  %v294 = vshrl.u32 %v293, 7
  %v295 = vsub.s32 2, %v294
  %v296 = vrot.slane %v283, %v295
  %v297 = vlaneseq
  %v298 = vshrl.u32 %v297, 7
  %v299 = vsub.s32 3, %v298
  %v300 = vrot.slane %v283, %v299
  %v305 = vmul.f32 %v280, %v288
  %v306 = vmul.f32 %v279, %v292
  %v307 = vmul.f32 %v278, %v296
  %v308 = vmul.f32 %v281, %v300
  %v313 = vrot.slane %v305, 4
  %v314 = vrot.slane %v306, 4
  %v315 = vrot.slane %v307, 4
  %v316 = vrot.slane %v308, 4
  %v321 = vsel %vm160, %v59, %v313
  %v322 = vsel %vm160, %v63, %v314
  %v323 = vsel %vm160, %v60, %v315
  %v324 = vsel %vm160, %v64, %v316
  %325 = vst [vmem:[#allocation2 + $0x40] sm:$0xff] %v321
  %326 = vst [vmem:[#allocation2 + $0x48] sm:$0xff] %v322
  %327 = vst [vmem:[#allocation2 + $0x50] sm:$0xff] %v323
  %328 = vst [vmem:[#allocation2 + $0x58] sm:$0xff] %v324
  %329 = vrot.lane.b32.xlu0 %v59, 113
  %v330 = vpop.permute.xlu0 %329
  %331 = vrot.lane.b32.xlu0 %v63, 113
  %v332 = vpop.permute.xlu0 %331
  %333 = vrot.lane.b32.xlu0 %v60, 113
  %v334 = vpop.permute.xlu0 %333
  %335 = vrot.lane.b32.xlu0 %v64, 113
  %v336 = vpop.permute.xlu0 %335
  %vm337 = vcmp.lt.s32.totalorder %v76, 113
  %v338 = vsel %vm337, %v334, %v336
  %v339 = vsel %vm337, %v332, %v334
  %v340 = vsel %vm337, %v330, %v332
  %v341 = vsel %vm337, %v336, %v330
  %s342 = scalar_lea.vmem %s7, 6
  %v343 = vld [vmem:[%s342] ss:$8 sm:$0xf]
  %v345 = vlaneseq
  %v346 = vshrl.u32 %v345, 7
  %v347 = vsub.s32 0, %v346
  %v348 = vrot.slane %v343, %v347
  %v349 = vlaneseq
  %v350 = vshrl.u32 %v349, 7
  %v351 = vsub.s32 1, %v350
  %v352 = vrot.slane %v343, %v351
  %v353 = vlaneseq
  %v354 = vshrl.u32 %v353, 7
  %v355 = vsub.s32 2, %v354
  %v356 = vrot.slane %v343, %v355
  %v357 = vlaneseq
  %v358 = vshrl.u32 %v357, 7
  %v359 = vsub.s32 3, %v358
  %v360 = vrot.slane %v343, %v359
  %v365 = vmul.f32 %v340, %v348
  %v366 = vmul.f32 %v339, %v352
  %v367 = vmul.f32 %v338, %v356
  %v368 = vmul.f32 %v341, %v360
  %369 = vrot.lane.b32.xlu0 %v59, 112
  %v370 = vpop.permute.xlu0 %369
  %371 = vrot.lane.b32.xlu0 %v63, 112
  %v372 = vpop.permute.xlu0 %371
  %373 = vrot.lane.b32.xlu0 %v60, 112
  %v374 = vpop.permute.xlu0 %373
  %375 = vrot.lane.b32.xlu0 %v64, 112
  %v376 = vpop.permute.xlu0 %375
  %vm377 = vcmp.lt.s32.totalorder %v76, 112
  %v378 = vsel %vm377, %v374, %v376
  %v379 = vsel %vm377, %v372, %v374
  %v380 = vsel %vm377, %v370, %v372
  %v381 = vsel %vm377, %v376, %v370
  %s382 = scalar_lea.vmem %s7, 7
  %v383 = vld [vmem:[%s382] ss:$8 sm:$0xf]
  %v385 = vlaneseq
  %v386 = vshrl.u32 %v385, 7
  %v387 = vsub.s32 0, %v386
  %v388 = vrot.slane %v383, %v387
  %v389 = vlaneseq
  %v390 = vshrl.u32 %v389, 7
  %v391 = vsub.s32 1, %v390
  %v392 = vrot.slane %v383, %v391
  %v393 = vlaneseq
  %v394 = vshrl.u32 %v393, 7
  %v395 = vsub.s32 2, %v394
  %v396 = vrot.slane %v383, %v395
  %v397 = vlaneseq
  %v398 = vshrl.u32 %v397, 7
  %v399 = vsub.s32 3, %v398
  %v400 = vrot.slane %v383, %v399
  %v405 = vmul.f32 %v380, %v388
  %v406 = vmul.f32 %v379, %v392
  %v407 = vmul.f32 %v378, %v396
  %v408 = vmul.f32 %v381, %v400
  %v413 = vrot.slane %v405, 4
  %v414 = vrot.slane %v406, 4
  %v415 = vrot.slane %v407, 4
  %v416 = vrot.slane %v408, 4
  %v421 = vsel %vm160, %v365, %v413
  %v422 = vsel %vm160, %v366, %v414
  %v423 = vsel %vm160, %v367, %v415
  %v424 = vsel %vm160, %v368, %v416
  %425 = vst [vmem:[#allocation2 + $0x60] sm:$0xff] %v421
  %426 = vst [vmem:[#allocation2 + $0x68] sm:$0xff] %v422
  %427 = vst [vmem:[#allocation2 + $0x70] sm:$0xff] %v423
  %428 = vst [vmem:[#allocation2 + $0x78] sm:$0xff] %v424
  %429 = vrot.lane.b32.xlu0 %v59, 111
  %v430 = vpop.permute.xlu0 %429
  %431 = vrot.lane.b32.xlu0 %v63, 111
  %v432 = vpop.permute.xlu0 %431
  %433 = vrot.lane.b32.xlu0 %v60, 111
  %v434 = vpop.permute.xlu0 %433
  %435 = vrot.lane.b32.xlu0 %v64, 111
  %v436 = vpop.permute.xlu0 %435
  %vm437 = vcmp.lt.s32.totalorder %v76, 111
  %v438 = vsel %vm437, %v434, %v436
  %v439 = vsel %vm437, %v432, %v434
  %v440 = vsel %vm437, %v430, %v432
  %v441 = vsel %vm437, %v436, %v430
  %s442 = scalar_lea.vmem %s7, 32
  %v443 = vld [vmem:[%s442] ss:$8 sm:$0xf]
  %v445 = vlaneseq
  %v446 = vshrl.u32 %v445, 7
  %v447 = vsub.s32 0, %v446
  %v448 = vrot.slane %v443, %v447
  %v449 = vlaneseq
  %v450 = vshrl.u32 %v449, 7
  %v451 = vsub.s32 1, %v450
  %v452 = vrot.slane %v443, %v451
  %v453 = vlaneseq
  %v454 = vshrl.u32 %v453, 7
  %v455 = vsub.s32 2, %v454
  %v456 = vrot.slane %v443, %v455
  %v457 = vlaneseq
  %v458 = vshrl.u32 %v457, 7
  %v459 = vsub.s32 3, %v458
  %v460 = vrot.slane %v443, %v459
  %v465 = vmul.f32 %v440, %v448
  %v466 = vmul.f32 %v439, %v452
  %v467 = vmul.f32 %v438, %v456
  %v468 = vmul.f32 %v441, %v460
  %v469 = vsel %vm160, %v465, 0.0
  %v470 = vsel %vm160, %v466, 0.0
  %v471 = vsel %vm160, %v467, 0.0
  %v472 = vsel %vm160, %v468, 0.0
  %473 = vst [vmem:[#allocation2 + $0x80] sm:$0xff] %v469
  %474 = vst [vmem:[#allocation2 + $0x88] sm:$0xff] %v470
  %475 = vst [vmem:[#allocation2 + $0x90] sm:$0xff] %v471
  %476 = vst [vmem:[#allocation2 + $0x98] sm:$0xff] %v472
  %v477 = vld [vmem:[%s3] sm:$0xf]
  %v478 = vld [vmem:[#allocation2] sm:$0xff]
  %v479 = vld [vmem:[#allocation2 + $0x8] sm:$0xff]
  %v480 = vld [vmem:[#allocation2 + $0x10] sm:$0xff]
  %v481 = vld [vmem:[#allocation2 + $0x18] sm:$0xff]
  %v482 = vld [vmem:[#allocation2 + $0x20] sm:$0xff]
  %v483 = vld [vmem:[#allocation2 + $0x28] sm:$0xff]
  %v484 = vld [vmem:[#allocation2 + $0x30] sm:$0xff]
  %v485 = vld [vmem:[#allocation2 + $0x38] sm:$0xff]
  %v486 = vld [vmem:[#allocation2 + $0x40] sm:$0xff]
  %v487 = vld [vmem:[#allocation2 + $0x48] sm:$0xff]
  %v488 = vld [vmem:[#allocation2 + $0x50] sm:$0xff]
  %v489 = vld [vmem:[#allocation2 + $0x58] sm:$0xff]
  %v490 = vld [vmem:[#allocation2 + $0x60] sm:$0xff]
  %v491 = vld [vmem:[#allocation2 + $0x68] sm:$0xff]
  %v492 = vld [vmem:[#allocation2 + $0x70] sm:$0xff]
  %v493 = vld [vmem:[#allocation2 + $0x78] sm:$0xff]
  %v494 = vld [vmem:[#allocation2 + $0x80] sm:$0xff]
  %v495 = vld [vmem:[#allocation2 + $0x88] sm:$0xff]
  %v496 = vld [vmem:[#allocation2 + $0x90] sm:$0xff]
  %v497 = vld [vmem:[#allocation2 + $0x98] sm:$0xff]
  %vm498 = vcmask 326656
  %v500 = vsel %vm498, %v477, 0
  %502 = vmatprep.subr.mxu0 %v479
  %503 = vmatpush1.msra.mxu0 %v478
  %504 = vmatprep.subr.mxu0 %v483
  %505 = vmatpush1.msra.mxu0 %v482
  %506 = vmatprep.subr.mxu0 %v487
  %507 = vmatpush1.msra.mxu0 %v486
  %508 = vmatprep.subr.mxu0 %v491
  %509 = vmatpush1.msra.mxu0 %v490
  %510 = vmatprep.subr.mxu0 %v495
  %511 = vmatpush1.msra.mxu0 %v494
  %512 = vmatprep.subr.mxu0 0.0
  %513 = vmatpush1.msra.mxu0 0.0
  %514 = vmatprep.subr.mxu0 0.0
  %515 = vmatpush1.msra.mxu0 0.0
  %516 = vmatprep.subr.mxu0 0.0
  %517 = vmatpush1.msra.mxu0 0.0
  %518 = vmatprep.subr.mxu0 0.0
  %519 = vmatpush1.msra.mxu0 0.0
  %520 = vmatprep.subr.mxu0 0.0
  %521 = vmatpush1.msra.mxu0 0.0
  %522 = vmatprep.subr.mxu0 0.0
  %523 = vmatpush1.msra.mxu0 0.0
  %524 = vmatprep.subr.mxu0 0.0
  %525 = vmatpush1.msra.mxu0 0.0
  %526 = vmatprep.subr.mxu0 0.0
  %527 = vmatpush1.msra.mxu0 0.0
  %528 = vmatprep.subr.mxu0 0.0
  %529 = vmatpush1.msra.mxu0 0.0
  %530 = vmatprep.subr.mxu0 0.0
  %531 = vmatpush1.msra.mxu0 0.0
  %532 = vmatprep.subr.mxu0 0.0
  %533 = vmatpush1.msra.mxu0 0.0
  %534 = vmatprep.subr.mxu0 0.0
  %535 = vmatpush1.msra.mxu0 0.0
  %536 = vmatprep.subr.mxu0 0.0
  %537 = vmatpush1.msra.mxu0 0.0
  %538 = vmatprep.subr.mxu0 0.0
  %539 = vmatpush1.msra.mxu0 0.0
  %540 = vmatprep.subr.mxu0 0.0
  %541 = vmatpush1.msra.mxu0 0.0
  %542 = vmatprep.subr.mxu0 0.0
  %543 = vmatpush1.msra.mxu0 0.0
  %544 = vmatprep.subr.mxu0 0.0
  %545 = vmatpush1.msra.mxu0 0.0
  %546 = vmatprep.subr.mxu0 0.0
  %547 = vmatpush1.msra.mxu0 0.0
  %548 = vmatprep.subr.mxu0 0.0
  %549 = vmatpush1.msra.mxu0 0.0
  %550 = vmatprep.subr.mxu0 0.0
  %551 = vmatpush1.msra.mxu0 0.0
  %552 = vmatprep.subr.mxu0 0.0
  %553 = vmatpush1.msra.mxu0 0.0
  %554 = vmatprep.subr.mxu0 0.0
  %555 = vmatpush1.msra.mxu0 0.0
  %556 = vmatprep.subr.mxu0 0.0
  %557 = vmatpush1.msra.mxu0 0.0
  %558 = vmatprep.subr.mxu0 0.0
  %559 = vmatpush1.msra.mxu0 0.0
  %560 = vmatprep.subr.mxu0 0.0
  %561 = vmatpush1.msra.mxu0 0.0
  %562 = vmatprep.subr.mxu0 0.0
  %563 = vmatpush1.msra.mxu0 0.0
  %564 = vmatprep.subr.mxu0 0.0
  %565 = vmatpush1.msra.mxu0 0.0
  %566 = vmatprep.mubr.f32.mxu0 0.0
  %567 = vmatmul.mubr.f32.gmra.mrb[0].mxu0 %v500
  %v568 = vpop.f32.mrb[0].mxu0
  %v569 = vadd.f32 0.0, %v568
  %v570 = vpop.f32.mrb[0].mxu0
  %v571 = vadd.f32 0.0, %v570
  %572 = vdwg.mxu0
  %573 = vmatprep.subr.mxu0 %v481
  %574 = vmatpush1.msra.mxu0 %v480
  %575 = vmatprep.subr.mxu0 %v485
  %576 = vmatpush1.msra.mxu0 %v484
  %577 = vmatprep.subr.mxu0 %v489
  %578 = vmatpush1.msra.mxu0 %v488
  %579 = vmatprep.subr.mxu0 %v493
  %580 = vmatpush1.msra.mxu0 %v492
  %581 = vmatprep.subr.mxu0 %v497
  %582 = vmatpush1.msra.mxu0 %v496
  %583 = vmatprep.subr.mxu0 0.0
  %584 = vmatpush1.msra.mxu0 0.0
  %585 = vmatprep.subr.mxu0 0.0
  %586 = vmatpush1.msra.mxu0 0.0
  %587 = vmatprep.subr.mxu0 0.0
  %588 = vmatpush1.msra.mxu0 0.0
  %589 = vmatprep.subr.mxu0 0.0
  %590 = vmatpush1.msra.mxu0 0.0
  %591 = vmatprep.subr.mxu0 0.0
  %592 = vmatpush1.msra.mxu0 0.0
  %593 = vmatprep.subr.mxu0 0.0
  %594 = vmatpush1.msra.mxu0 0.0
  %595 = vmatprep.subr.mxu0 0.0
  %596 = vmatpush1.msra.mxu0 0.0
  %597 = vmatprep.subr.mxu0 0.0
  %598 = vmatpush1.msra.mxu0 0.0
  %599 = vmatprep.subr.mxu0 0.0
  %600 = vmatpush1.msra.mxu0 0.0
  %601 = vmatprep.subr.mxu0 0.0
  %602 = vmatpush1.msra.mxu0 0.0
  %603 = vmatprep.subr.mxu0 0.0
  %604 = vmatpush1.msra.mxu0 0.0
  %605 = vmatprep.subr.mxu0 0.0
  %606 = vmatpush1.msra.mxu0 0.0
  %607 = vmatprep.subr.mxu0 0.0
  %608 = vmatpush1.msra.mxu0 0.0
  %609 = vmatprep.subr.mxu0 0.0
  %610 = vmatpush1.msra.mxu0 0.0
  %611 = vmatprep.subr.mxu0 0.0
  %612 = vmatpush1.msra.mxu0 0.0
  %613 = vmatprep.subr.mxu0 0.0
  %614 = vmatpush1.msra.mxu0 0.0
  %615 = vmatprep.subr.mxu0 0.0
  %616 = vmatpush1.msra.mxu0 0.0
  %617 = vmatprep.subr.mxu0 0.0
  %618 = vmatpush1.msra.mxu0 0.0
  %619 = vmatprep.subr.mxu0 0.0
  %620 = vmatpush1.msra.mxu0 0.0
  %621 = vmatprep.subr.mxu0 0.0
  %622 = vmatpush1.msra.mxu0 0.0
  %623 = vmatprep.subr.mxu0 0.0
  %624 = vmatpush1.msra.mxu0 0.0
  %625 = vmatprep.subr.mxu0 0.0
  %626 = vmatpush1.msra.mxu0 0.0
  %627 = vmatprep.subr.mxu0 0.0
  %628 = vmatpush1.msra.mxu0 0.0
  %629 = vmatprep.subr.mxu0 0.0
  %630 = vmatpush1.msra.mxu0 0.0
  %631 = vmatprep.subr.mxu0 0.0
  %632 = vmatpush1.msra.mxu0 0.0
  %633 = vmatprep.subr.mxu0 0.0
  %634 = vmatpush1.msra.mxu0 0.0
  %635 = vmatprep.subr.mxu0 0.0
  %636 = vmatpush1.msra.mxu0 0.0
  %637 = vmatprep.mubr.f32.mxu0 0.0
  %638 = vmatmul.mubr.f32.gmra.mrb[0].mxu0 %v500
  %v639 = vpop.f32.mrb[0].mxu0
  %v640 = vadd.f32 0.0, %v639
  %v641 = vpop.f32.mrb[0].mxu0
  %v642 = vadd.f32 0.0, %v641
  %643 = vdwg.mxu0
  %v644 = vld [vmem:[%s4] sm:$0xf]
  %646 = vset.pattern.permute.xlu0 0
  %647 = vperm.xlu0 %646, %v644
  %v648 = vpop.permute.xlu0 %647
  %v650 = vmul.f32 %v569, %v648
  %v651 = vmul.f32 %v571, %v648
  %v652 = vmul.f32 %v640, %v648
  %v653 = vmul.f32 %v642, %v648
  %v654 = vld [vmem:[%s5] sm:$0xf]
  %656 = vset.pattern.permute.xlu0 0
  %657 = vperm.xlu0 %656, %v654
  %v658 = vpop.permute.xlu0 %657
  %v660 = vadd.f32 %v650, %v658
  %v661 = vadd.f32 %v651, %v658
  %v662 = vadd.f32 %v652, %v658
  %v663 = vadd.f32 %v653, %v658
  %v664 = vmax.f32 %v660, 0.0
  %v665 = vmax.f32 %v661, 0.0
  %v666 = vmax.f32 %v662, 0.0
  %v667 = vmax.f32 %v663, 0.0
  %668 = vrot.lane.b32.xlu0 %v664, 17
  %v669 = vpop.permute.xlu0 %668
  %670 = vrot.lane.b32.xlu0 %v665, 17
  %v671 = vpop.permute.xlu0 %670
  %672 = vrot.lane.b32.xlu0 %v666, 17
  %v673 = vpop.permute.xlu0 %672
  %674 = vrot.lane.b32.xlu0 %v667, 17
  %v675 = vpop.permute.xlu0 %674
  %v676 = vsel %vm77, %v673, %v675
  %v677 = vsel %vm77, %v671, %v673
  %v678 = vsel %vm77, %v669, %v671
  %v679 = vsel %vm77, %v675, %v669
  %v680 = vld [vmem:[%s7] ss:$8 sm:$0xf]
  %v682 = vlaneseq
  %v683 = vshrl.u32 %v682, 7
  %v684 = vsub.s32 0, %v683
  %v685 = vrot.slane %v680, %v684
  %v686 = vlaneseq
  %v687 = vshrl.u32 %v686, 7
  %v688 = vsub.s32 1, %v687
  %v689 = vrot.slane %v680, %v688
  %v690 = vlaneseq
  %v691 = vshrl.u32 %v690, 7
  %v692 = vsub.s32 2, %v691
  %v693 = vrot.slane %v680, %v692
  %v694 = vlaneseq
  %v695 = vshrl.u32 %v694, 7
  %v696 = vsub.s32 3, %v695
  %v697 = vrot.slane %v680, %v696
  %v702 = vmul.f32 %v679, %v685
  %v703 = vmul.f32 %v678, %v689
  %v704 = vmul.f32 %v677, %v693
  %v705 = vmul.f32 %v676, %v697
  %706 = vrot.lane.b32.xlu0 %v664, 16
  %v707 = vpop.permute.xlu0 %706
  %708 = vrot.lane.b32.xlu0 %v665, 16
  %v709 = vpop.permute.xlu0 %708
  %710 = vrot.lane.b32.xlu0 %v666, 16
  %v711 = vpop.permute.xlu0 %710
  %712 = vrot.lane.b32.xlu0 %v667, 16
  %v713 = vpop.permute.xlu0 %712
  %v714 = vsel %vm116, %v711, %v713
  %v715 = vsel %vm116, %v709, %v711
  %v716 = vsel %vm116, %v707, %v709
  %v717 = vsel %vm116, %v713, %v707
  %v718 = vld [vmem:[%s121] ss:$8 sm:$0xf]
  %v720 = vlaneseq
  %v721 = vshrl.u32 %v720, 7
  %v722 = vsub.s32 0, %v721
  %v723 = vrot.slane %v718, %v722
  %v724 = vlaneseq
  %v725 = vshrl.u32 %v724, 7
  %v726 = vsub.s32 1, %v725
  %v727 = vrot.slane %v718, %v726
  %v728 = vlaneseq
  %v729 = vshrl.u32 %v728, 7
  %v730 = vsub.s32 2, %v729
  %v731 = vrot.slane %v718, %v730
  %v732 = vlaneseq
  %v733 = vshrl.u32 %v732, 7
  %v734 = vsub.s32 3, %v733
  %v735 = vrot.slane %v718, %v734
  %v740 = vmul.f32 %v717, %v723
  %v741 = vmul.f32 %v716, %v727
  %v742 = vmul.f32 %v715, %v731
  %v743 = vmul.f32 %v714, %v735
  %v748 = vrot.slane %v740, 4
  %v749 = vrot.slane %v741, 4
  %v750 = vrot.slane %v742, 4
  %v751 = vrot.slane %v743, 4
  %v756 = vsel %vm160, %v702, %v748
  %v757 = vsel %vm160, %v703, %v749
  %v758 = vsel %vm160, %v704, %v750
  %v759 = vsel %vm160, %v705, %v751
  %760 = vst [vmem:[#allocation2] sm:$0xff] %v756
  %761 = vst [vmem:[#allocation2 + $0x8] sm:$0xff] %v757
  %762 = vst [vmem:[#allocation2 + $0x10] sm:$0xff] %v758
  %763 = vst [vmem:[#allocation2 + $0x18] sm:$0xff] %v759
  %764 = vrot.lane.b32.xlu0 %v664, 15
  %v765 = vpop.permute.xlu0 %764
  %766 = vrot.lane.b32.xlu0 %v665, 15
  %v767 = vpop.permute.xlu0 %766
  %768 = vrot.lane.b32.xlu0 %v666, 15
  %v769 = vpop.permute.xlu0 %768
  %770 = vrot.lane.b32.xlu0 %v667, 15
  %v771 = vpop.permute.xlu0 %770
  %v772 = vsel %vm177, %v769, %v771
  %v773 = vsel %vm177, %v767, %v769
  %v774 = vsel %vm177, %v765, %v767
  %v775 = vsel %vm177, %v771, %v765
  %v776 = vld [vmem:[%s182] ss:$8 sm:$0xf]
  %v778 = vlaneseq
  %v779 = vshrl.u32 %v778, 7
  %v780 = vsub.s32 0, %v779
  %v781 = vrot.slane %v776, %v780
  %v782 = vlaneseq
  %v783 = vshrl.u32 %v782, 7
  %v784 = vsub.s32 1, %v783
  %v785 = vrot.slane %v776, %v784
  %v786 = vlaneseq
  %v787 = vshrl.u32 %v786, 7
  %v788 = vsub.s32 2, %v787
  %v789 = vrot.slane %v776, %v788
  %v790 = vlaneseq
  %v791 = vshrl.u32 %v790, 7
  %v792 = vsub.s32 3, %v791
  %v793 = vrot.slane %v776, %v792
  %v798 = vmul.f32 %v775, %v781
  %v799 = vmul.f32 %v774, %v785
  %v800 = vmul.f32 %v773, %v789
  %v801 = vmul.f32 %v772, %v793
  %802 = vrot.lane.b32.xlu0 %v664, 1
  %v803 = vpop.permute.xlu0 %802
  %804 = vrot.lane.b32.xlu0 %v665, 1
  %v805 = vpop.permute.xlu0 %804
  %806 = vrot.lane.b32.xlu0 %v666, 1
  %v807 = vpop.permute.xlu0 %806
  %808 = vrot.lane.b32.xlu0 %v667, 1
  %v809 = vpop.permute.xlu0 %808
  %v810 = vsel %vm217, %v807, %v809
  %v811 = vsel %vm217, %v805, %v807
  %v812 = vsel %vm217, %v803, %v805
  %v813 = vsel %vm217, %v809, %v803
  %v814 = vld [vmem:[%s222] ss:$8 sm:$0xf]
  %v816 = vlaneseq
  %v817 = vshrl.u32 %v816, 7
  %v818 = vsub.s32 0, %v817
  %v819 = vrot.slane %v814, %v818
  %v820 = vlaneseq
  %v821 = vshrl.u32 %v820, 7
  %v822 = vsub.s32 1, %v821
  %v823 = vrot.slane %v814, %v822
  %v824 = vlaneseq
  %v825 = vshrl.u32 %v824, 7
  %v826 = vsub.s32 2, %v825
  %v827 = vrot.slane %v814, %v826
  %v828 = vlaneseq
  %v829 = vshrl.u32 %v828, 7
  %v830 = vsub.s32 3, %v829
  %v831 = vrot.slane %v814, %v830
  %v836 = vmul.f32 %v813, %v819
  %v837 = vmul.f32 %v812, %v823
  %v838 = vmul.f32 %v811, %v827
  %v839 = vmul.f32 %v810, %v831
  %v844 = vrot.slane %v836, 4
  %v845 = vrot.slane %v837, 4
  %v846 = vrot.slane %v838, 4
  %v847 = vrot.slane %v839, 4
  %v852 = vsel %vm160, %v798, %v844
  %v853 = vsel %vm160, %v799, %v845
  %v854 = vsel %vm160, %v800, %v846
  %v855 = vsel %vm160, %v801, %v847
  %856 = vst [vmem:[#allocation2 + $0x20] sm:$0xff] %v852
  %857 = vst [vmem:[#allocation2 + $0x28] sm:$0xff] %v853
  %858 = vst [vmem:[#allocation2 + $0x30] sm:$0xff] %v854
  %859 = vst [vmem:[#allocation2 + $0x38] sm:$0xff] %v855
  %860 = vrot.lane.b32.xlu0 %v664, 127
  %v861 = vpop.permute.xlu0 %860
  %862 = vrot.lane.b32.xlu0 %v665, 127
  %v863 = vpop.permute.xlu0 %862
  %864 = vrot.lane.b32.xlu0 %v666, 127
  %v865 = vpop.permute.xlu0 %864
  %866 = vrot.lane.b32.xlu0 %v667, 127
  %v867 = vpop.permute.xlu0 %866
  %v868 = vsel %vm277, %v865, %v867
  %v869 = vsel %vm277, %v863, %v865
  %v870 = vsel %vm277, %v861, %v863
  %v871 = vsel %vm277, %v867, %v861
  %v872 = vld [vmem:[%s282] ss:$8 sm:$0xf]
  %v874 = vlaneseq
  %v875 = vshrl.u32 %v874, 7
  %v876 = vsub.s32 0, %v875
  %v877 = vrot.slane %v872, %v876
  %v878 = vlaneseq
  %v879 = vshrl.u32 %v878, 7
  %v880 = vsub.s32 1, %v879
  %v881 = vrot.slane %v872, %v880
  %v882 = vlaneseq
  %v883 = vshrl.u32 %v882, 7
  %v884 = vsub.s32 2, %v883
  %v885 = vrot.slane %v872, %v884
  %v886 = vlaneseq
  %v887 = vshrl.u32 %v886, 7
  %v888 = vsub.s32 3, %v887
  %v889 = vrot.slane %v872, %v888
  %v894 = vmul.f32 %v870, %v877
  %v895 = vmul.f32 %v869, %v881
  %v896 = vmul.f32 %v868, %v885
  %v897 = vmul.f32 %v871, %v889
  %v902 = vrot.slane %v894, 4
  %v903 = vrot.slane %v895, 4
  %v904 = vrot.slane %v896, 4
  %v905 = vrot.slane %v897, 4
  %v910 = vsel %vm160, %v664, %v902
  %v911 = vsel %vm160, %v665, %v903
  %v912 = vsel %vm160, %v666, %v904
  %v913 = vsel %vm160, %v667, %v905
  %914 = vst [vmem:[#allocation2 + $0x40] sm:$0xff] %v910
  %915 = vst [vmem:[#allocation2 + $0x48] sm:$0xff] %v911
  %916 = vst [vmem:[#allocation2 + $0x50] sm:$0xff] %v912
  %917 = vst [vmem:[#allocation2 + $0x58] sm:$0xff] %v913
  %918 = vrot.lane.b32.xlu0 %v664, 113
  %v919 = vpop.permute.xlu0 %918
  %920 = vrot.lane.b32.xlu0 %v665, 113
  %v921 = vpop.permute.xlu0 %920
  %922 = vrot.lane.b32.xlu0 %v666, 113
  %v923 = vpop.permute.xlu0 %922
  %924 = vrot.lane.b32.xlu0 %v667, 113
  %v925 = vpop.permute.xlu0 %924
  %v926 = vsel %vm337, %v923, %v925
  %v927 = vsel %vm337, %v921, %v923
  %v928 = vsel %vm337, %v919, %v921
  %v929 = vsel %vm337, %v925, %v919
  %v930 = vld [vmem:[%s342] ss:$8 sm:$0xf]
  %v932 = vlaneseq
  %v933 = vshrl.u32 %v932, 7
  %v934 = vsub.s32 0, %v933
  %v935 = vrot.slane %v930, %v934
  %v936 = vlaneseq
  %v937 = vshrl.u32 %v936, 7
  %v938 = vsub.s32 1, %v937
  %v939 = vrot.slane %v930, %v938
  %v940 = vlaneseq
  %v941 = vshrl.u32 %v940, 7
  %v942 = vsub.s32 2, %v941
  %v943 = vrot.slane %v930, %v942
  %v944 = vlaneseq
  %v945 = vshrl.u32 %v944, 7
  %v946 = vsub.s32 3, %v945
  %v947 = vrot.slane %v930, %v946
  %v952 = vmul.f32 %v928, %v935
  %v953 = vmul.f32 %v927, %v939
  %v954 = vmul.f32 %v926, %v943
  %v955 = vmul.f32 %v929, %v947
  %956 = vrot.lane.b32.xlu0 %v664, 112
  %v957 = vpop.permute.xlu0 %956
  %958 = vrot.lane.b32.xlu0 %v665, 112
  %v959 = vpop.permute.xlu0 %958
  %960 = vrot.lane.b32.xlu0 %v666, 112
  %v961 = vpop.permute.xlu0 %960
  %962 = vrot.lane.b32.xlu0 %v667, 112
  %v963 = vpop.permute.xlu0 %962
  %v964 = vsel %vm377, %v961, %v963
  %v965 = vsel %vm377, %v959, %v961
  %v966 = vsel %vm377, %v957, %v959
  %v967 = vsel %vm377, %v963, %v957
  %v968 = vld [vmem:[%s382] ss:$8 sm:$0xf]
  %v970 = vlaneseq
  %v971 = vshrl.u32 %v970, 7
  %v972 = vsub.s32 0, %v971
  %v973 = vrot.slane %v968, %v972
  %v974 = vlaneseq
  %v975 = vshrl.u32 %v974, 7
  %v976 = vsub.s32 1, %v975
  %v977 = vrot.slane %v968, %v976
  %v978 = vlaneseq
  %v979 = vshrl.u32 %v978, 7
  %v980 = vsub.s32 2, %v979
  %v981 = vrot.slane %v968, %v980
  %v982 = vlaneseq
  %v983 = vshrl.u32 %v982, 7
  %v984 = vsub.s32 3, %v983
  %v985 = vrot.slane %v968, %v984
  %v990 = vmul.f32 %v966, %v973
  %v991 = vmul.f32 %v965, %v977
  %v992 = vmul.f32 %v964, %v981
  %v993 = vmul.f32 %v967, %v985
  %v998 = vrot.slane %v990, 4
  %v999 = vrot.slane %v991, 4
  %v1000 = vrot.slane %v992, 4
  %v1001 = vrot.slane %v993, 4
  %v1006 = vsel %vm160, %v952, %v998
  %v1007 = vsel %vm160, %v953, %v999
  %v1008 = vsel %vm160, %v954, %v1000
  %v1009 = vsel %vm160, %v955, %v1001
  %1010 = vst [vmem:[#allocation2 + $0x60] sm:$0xff] %v1006
  %1011 = vst [vmem:[#allocation2 + $0x68] sm:$0xff] %v1007
  %1012 = vst [vmem:[#allocation2 + $0x70] sm:$0xff] %v1008
  %1013 = vst [vmem:[#allocation2 + $0x78] sm:$0xff] %v1009
  %1014 = vrot.lane.b32.xlu0 %v664, 111
  %v1015 = vpop.permute.xlu0 %1014
  %1016 = vrot.lane.b32.xlu0 %v665, 111
  %v1017 = vpop.permute.xlu0 %1016
  %1018 = vrot.lane.b32.xlu0 %v666, 111
  %v1019 = vpop.permute.xlu0 %1018
  %1020 = vrot.lane.b32.xlu0 %v667, 111
  %v1021 = vpop.permute.xlu0 %1020
  %v1022 = vsel %vm437, %v1019, %v1021
  %v1023 = vsel %vm437, %v1017, %v1019
  %v1024 = vsel %vm437, %v1015, %v1017
  %v1025 = vsel %vm437, %v1021, %v1015
  %v1026 = vld [vmem:[%s442] ss:$8 sm:$0xf]
  %v1028 = vlaneseq
  %v1029 = vshrl.u32 %v1028, 7
  %v1030 = vsub.s32 0, %v1029
  %v1031 = vrot.slane %v1026, %v1030
  %v1032 = vlaneseq
  %v1033 = vshrl.u32 %v1032, 7
  %v1034 = vsub.s32 1, %v1033
  %v1035 = vrot.slane %v1026, %v1034
  %v1036 = vlaneseq
  %v1037 = vshrl.u32 %v1036, 7
  %v1038 = vsub.s32 2, %v1037
  %v1039 = vrot.slane %v1026, %v1038
  %v1040 = vlaneseq
  %v1041 = vshrl.u32 %v1040, 7
  %v1042 = vsub.s32 3, %v1041
  %v1043 = vrot.slane %v1026, %v1042
  %v1048 = vmul.f32 %v1024, %v1031
  %v1049 = vmul.f32 %v1023, %v1035
  %v1050 = vmul.f32 %v1022, %v1039
  %v1051 = vmul.f32 %v1025, %v1043
  %v1052 = vsel %vm160, %v1048, 0.0
  %v1053 = vsel %vm160, %v1049, 0.0
  %v1054 = vsel %vm160, %v1050, 0.0
  %v1055 = vsel %vm160, %v1051, 0.0
  %1056 = vst [vmem:[#allocation2 + $0x80] sm:$0xff] %v1052
  %1057 = vst [vmem:[#allocation2 + $0x88] sm:$0xff] %v1053
  %1058 = vst [vmem:[#allocation2 + $0x90] sm:$0xff] %v1054
  %1059 = vst [vmem:[#allocation2 + $0x98] sm:$0xff] %v1055
  %v1060 = vld [vmem:[%s6] sm:$0xf]
  %v1061 = vld [vmem:[#allocation2] sm:$0xff]
  %v1062 = vld [vmem:[#allocation2 + $0x8] sm:$0xff]
  %v1063 = vld [vmem:[#allocation2 + $0x10] sm:$0xff]
  %v1064 = vld [vmem:[#allocation2 + $0x18] sm:$0xff]
  %v1065 = vld [vmem:[#allocation2 + $0x20] sm:$0xff]
  %v1066 = vld [vmem:[#allocation2 + $0x28] sm:$0xff]
  %v1067 = vld [vmem:[#allocation2 + $0x30] sm:$0xff]
  %v1068 = vld [vmem:[#allocation2 + $0x38] sm:$0xff]
  %v1069 = vld [vmem:[#allocation2 + $0x40] sm:$0xff]
  %v1070 = vld [vmem:[#allocation2 + $0x48] sm:$0xff]
  %v1071 = vld [vmem:[#allocation2 + $0x50] sm:$0xff]
  %v1072 = vld [vmem:[#allocation2 + $0x58] sm:$0xff]
  %v1073 = vld [vmem:[#allocation2 + $0x60] sm:$0xff]
  %v1074 = vld [vmem:[#allocation2 + $0x68] sm:$0xff]
  %v1075 = vld [vmem:[#allocation2 + $0x70] sm:$0xff]
  %v1076 = vld [vmem:[#allocation2 + $0x78] sm:$0xff]
  %v1077 = vld [vmem:[#allocation2 + $0x80] sm:$0xff]
  %v1078 = vld [vmem:[#allocation2 + $0x88] sm:$0xff]
  %v1079 = vld [vmem:[#allocation2 + $0x90] sm:$0xff]
  %v1080 = vld [vmem:[#allocation2 + $0x98] sm:$0xff]
  %v1083 = vcombine.high %v29, %v29
  %v1084 = vcombine.high %v30, %v30
  %v1088 = vsel %vm498, %v1060, 0
  %1090 = vmatprep.subr.mxu0 %v1062
  %1091 = vmatpush1.msra.mxu0 %v1061
  %1092 = vmatprep.subr.mxu0 %v1066
  %1093 = vmatpush1.msra.mxu0 %v1065
  %1094 = vmatprep.subr.mxu0 %v1070
  %1095 = vmatpush1.msra.mxu0 %v1069
  %1096 = vmatprep.subr.mxu0 %v1074
  %1097 = vmatpush1.msra.mxu0 %v1073
  %1098 = vmatprep.subr.mxu0 %v1078
  %1099 = vmatpush1.msra.mxu0 %v1077
  %1100 = vmatprep.subr.mxu0 0.0
  %1101 = vmatpush1.msra.mxu0 0.0
  %1102 = vmatprep.subr.mxu0 0.0
  %1103 = vmatpush1.msra.mxu0 0.0
  %1104 = vmatprep.subr.mxu0 0.0
  %1105 = vmatpush1.msra.mxu0 0.0
  %1106 = vmatprep.subr.mxu0 0.0
  %1107 = vmatpush1.msra.mxu0 0.0
  %1108 = vmatprep.subr.mxu0 0.0
  %1109 = vmatpush1.msra.mxu0 0.0
  %1110 = vmatprep.subr.mxu0 0.0
  %1111 = vmatpush1.msra.mxu0 0.0
  %1112 = vmatprep.subr.mxu0 0.0
  %1113 = vmatpush1.msra.mxu0 0.0
  %1114 = vmatprep.subr.mxu0 0.0
  %1115 = vmatpush1.msra.mxu0 0.0
  %1116 = vmatprep.subr.mxu0 0.0
  %1117 = vmatpush1.msra.mxu0 0.0
  %1118 = vmatprep.subr.mxu0 0.0
  %1119 = vmatpush1.msra.mxu0 0.0
  %1120 = vmatprep.subr.mxu0 0.0
  %1121 = vmatpush1.msra.mxu0 0.0
  %1122 = vmatprep.subr.mxu0 0.0
  %1123 = vmatpush1.msra.mxu0 0.0
  %1124 = vmatprep.subr.mxu0 0.0
  %1125 = vmatpush1.msra.mxu0 0.0
  %1126 = vmatprep.subr.mxu0 0.0
  %1127 = vmatpush1.msra.mxu0 0.0
  %1128 = vmatprep.subr.mxu0 0.0
  %1129 = vmatpush1.msra.mxu0 0.0
  %1130 = vmatprep.subr.mxu0 0.0
  %1131 = vmatpush1.msra.mxu0 0.0
  %1132 = vmatprep.subr.mxu0 0.0
  %1133 = vmatpush1.msra.mxu0 0.0
  %1134 = vmatprep.subr.mxu0 0.0
  %1135 = vmatpush1.msra.mxu0 0.0
  %1136 = vmatprep.subr.mxu0 0.0
  %1137 = vmatpush1.msra.mxu0 0.0
  %1138 = vmatprep.subr.mxu0 0.0
  %1139 = vmatpush1.msra.mxu0 0.0
  %1140 = vmatprep.subr.mxu0 0.0
  %1141 = vmatpush1.msra.mxu0 0.0
  %1142 = vmatprep.subr.mxu0 0.0
  %1143 = vmatpush1.msra.mxu0 0.0
  %1144 = vmatprep.subr.mxu0 0.0
  %1145 = vmatpush1.msra.mxu0 0.0
  %1146 = vmatprep.subr.mxu0 0.0
  %1147 = vmatpush1.msra.mxu0 0.0
  %1148 = vmatprep.subr.mxu0 0.0
  %1149 = vmatpush1.msra.mxu0 0.0
  %1150 = vmatprep.subr.mxu0 0.0
  %1151 = vmatpush1.msra.mxu0 0.0
  %1152 = vmatprep.subr.mxu0 0.0
  %1153 = vmatpush1.msra.mxu0 0.0
  %1154 = vmatprep.mubr.f32.mxu0 0.0
  %1155 = vmatmul.mubr.f32.gmra.mrb[0].mxu0 %v1088
  %v1156 = vpop.f32.mrb[0].mxu0
  %v1157 = vadd.f32 %v29, %v1156
  %v1158 = vpop.f32.mrb[0].mxu0
  %v1159 = vadd.f32 %v1083, %v1158
  %1160 = vdwg.mxu0
  %1161 = vmatprep.subr.mxu0 %v1064
  %1162 = vmatpush1.msra.mxu0 %v1063
  %1163 = vmatprep.subr.mxu0 %v1068
  %1164 = vmatpush1.msra.mxu0 %v1067
  %1165 = vmatprep.subr.mxu0 %v1072
  %1166 = vmatpush1.msra.mxu0 %v1071
  %1167 = vmatprep.subr.mxu0 %v1076
  %1168 = vmatpush1.msra.mxu0 %v1075
  %1169 = vmatprep.subr.mxu0 %v1080
  %1170 = vmatpush1.msra.mxu0 %v1079
  %1171 = vmatprep.subr.mxu0 0.0
  %1172 = vmatpush1.msra.mxu0 0.0
  %1173 = vmatprep.subr.mxu0 0.0
  %1174 = vmatpush1.msra.mxu0 0.0
  %1175 = vmatprep.subr.mxu0 0.0
  %1176 = vmatpush1.msra.mxu0 0.0
  %1177 = vmatprep.subr.mxu0 0.0
  %1178 = vmatpush1.msra.mxu0 0.0
  %1179 = vmatprep.subr.mxu0 0.0
  %1180 = vmatpush1.msra.mxu0 0.0
  %1181 = vmatprep.subr.mxu0 0.0
  %1182 = vmatpush1.msra.mxu0 0.0
  %1183 = vmatprep.subr.mxu0 0.0
  %1184 = vmatpush1.msra.mxu0 0.0
  %1185 = vmatprep.subr.mxu0 0.0
  %1186 = vmatpush1.msra.mxu0 0.0
  %1187 = vmatprep.subr.mxu0 0.0
  %1188 = vmatpush1.msra.mxu0 0.0
  %1189 = vmatprep.subr.mxu0 0.0
  %1190 = vmatpush1.msra.mxu0 0.0
  %1191 = vmatprep.subr.mxu0 0.0
  %1192 = vmatpush1.msra.mxu0 0.0
  %1193 = vmatprep.subr.mxu0 0.0
  %1194 = vmatpush1.msra.mxu0 0.0
  %1195 = vmatprep.subr.mxu0 0.0
  %1196 = vmatpush1.msra.mxu0 0.0
  %1197 = vmatprep.subr.mxu0 0.0
  %1198 = vmatpush1.msra.mxu0 0.0
  %1199 = vmatprep.subr.mxu0 0.0
  %1200 = vmatpush1.msra.mxu0 0.0
  %1201 = vmatprep.subr.mxu0 0.0
  %1202 = vmatpush1.msra.mxu0 0.0
  %1203 = vmatprep.subr.mxu0 0.0
  %1204 = vmatpush1.msra.mxu0 0.0
  %1205 = vmatprep.subr.mxu0 0.0
  %1206 = vmatpush1.msra.mxu0 0.0
  %1207 = vmatprep.subr.mxu0 0.0
  %1208 = vmatpush1.msra.mxu0 0.0
  %1209 = vmatprep.subr.mxu0 0.0
  %1210 = vmatpush1.msra.mxu0 0.0
  %1211 = vmatprep.subr.mxu0 0.0
  %1212 = vmatpush1.msra.mxu0 0.0
  %1213 = vmatprep.subr.mxu0 0.0
  %1214 = vmatpush1.msra.mxu0 0.0
  %1215 = vmatprep.subr.mxu0 0.0
  %1216 = vmatpush1.msra.mxu0 0.0
  %1217 = vmatprep.subr.mxu0 0.0
  %1218 = vmatpush1.msra.mxu0 0.0
  %1219 = vmatprep.subr.mxu0 0.0
  %1220 = vmatpush1.msra.mxu0 0.0
  %1221 = vmatprep.subr.mxu0 0.0
  %1222 = vmatpush1.msra.mxu0 0.0
  %1223 = vmatprep.subr.mxu0 0.0
  %1224 = vmatpush1.msra.mxu0 0.0
  %1225 = vmatprep.mubr.f32.mxu0 0.0
  %1226 = vmatmul.mubr.f32.gmra.mrb[0].mxu0 %v1088
  %v1227 = vpop.f32.mrb[0].mxu0
  %v1228 = vadd.f32 %v30, %v1227
  %v1229 = vpop.f32.mrb[0].mxu0
  %v1230 = vadd.f32 %v1084, %v1229
  %1231 = vdwg.mxu0
  %v1236 = vcombine.low %v1157, %v1159
  %v1237 = vcombine.low %v1228, %v1230
  %1240 = vst [vmem:[%s8] sm:$0xff] %v1236
  %1241 = vst [vmem:[%s8 + $0x8] sm:$0xff] %v1237
  // Predicated region
  $region34: #{residual_block_pallas.1} parent=0 // pred_check
    _
  $region35: #{residual_block_pallas.1} parent=0 // pred_check_branch
    %1243 = sbr.rel (0) target = $region37
  $region36: #{residual_block_pallas.1} parent=0 // pred_region
    _
  $region37: #{residual_block_pallas.1} parent=0 // pred_fallthru
    _
  // Predicated region
  $region38: #{residual_block_pallas.1} parent=0 // pred_check
    _
  $region39: #{residual_block_pallas.1} parent=0 // pred_check_branch
    %1245 = sbr.rel (0) target = $region41
  $region40: #{residual_block_pallas.1} parent=0 // pred_region
    _
  $region41: #{residual_block_pallas.1} parent=0 // pred_fallthru
    _

</llo_original>
